<compile_context>
chip_gen: v7x
topology: tpu7x:2x2x1
jax: 0.10.0
libtpu: 0.0.40
codegen_flags: <defaults>
</compile_context>

<pallas_src>
import math

import jax
import jax.numpy as jnp
from jax.experimental import pallas as pl
from jax.experimental.pallas import tpu as pltpu


def _copy_kernel(x_ref, o_ref):
    # Pure identity copy of one lane-dense 2D tile. No in-kernel reshape.
    o_ref[...] = x_ref[...]


def _choose_tile(dim: int, max_tile: int, align: int) -> int:
    """Full-extent block if it fits; otherwise an aligned large tile."""
    if dim <= max_tile:
        return dim                      # block == full array dim: always legal
    return max(align, (max_tile // align) * align)


def pallas_flatten(x: jax.Array, start_dim: int = 1, end_dim: int = -1) -> jax.Array:
    """Pallas equivalent of torch.nn.Flatten(start_dim, end_dim)."""
    ndim = x.ndim
    sd = start_dim % ndim
    ed = end_dim % ndim
    assert sd <= ed, "start_dim must not exceed end_dim"

    out_shape = x.shape[:sd] + (math.prod(x.shape[sd:ed + 1]),) + x.shape[ed + 1:]

    # NOTE: flatten over contiguous row-major dims is a zero-cost view; a
    # production implementation would simply `return jnp.reshape(x, out_shape)`.
    # The Pallas kernel below materializes the result with a tiled,
    # double-buffered copy (the only real data movement a Flatten can imply).

    # Lane-dense 2D view of the output layout (free metadata reshape).
    if len(out_shape) >= 2:
        rows = math.prod(out_shape[:-1])
        cols = out_shape[-1]
    else:
        rows = 1
        cols = math.prod(out_shape) if out_shape else 1
    x2d = jnp.reshape(x, (rows, cols))          # metadata only, no data movement

    # Large tiles: >=512 lanes when tiling (here 1024), sublane tile multiple
    # of 8; full-extent blocks for small dims.  Per-block f32 footprint at
    # (256, 1024) is 1 MiB -> ~4 MiB with in+out double buffering: fits every
    # generation's scoped VMEM (incl. v7x's 64 MiB physical) with room to spare.
    tr = _choose_tile(rows, 256, 8)
    tc = _choose_tile(cols, 1024, 128)
    grid = (pl.cdiv(rows, tr), pl.cdiv(cols, tc))

    itemsize = jnp.dtype(x.dtype).itemsize
    y2d = pl.pallas_call(
        _copy_kernel,
        out_shape=jax.ShapeDtypeStruct((rows, cols), x.dtype),
        grid=grid,
        in_specs=[pl.BlockSpec((tr, tc), lambda i, j: (i, j))],
        out_specs=pl.BlockSpec((tr, tc), lambda i, j: (i, j)),
        compiler_params=pltpu.CompilerParams(
            dimension_semantics=("parallel", "parallel")),
        cost_estimate=pl.CostEstimate(
            flops=0,
            transcendentals=0,
            bytes_accessed=2 * x.size * itemsize),
        # TODO(synk): expose input_output_aliases={0: 0} (buffer donation) for
        # callers that no longer need `x`, halving peak HBM footprint.
    )(x2d)

    return jnp.reshape(y2d, out_shape)          # metadata only


if __name__ == "__main__":
    key = jax.random.PRNGKey(0)

    # 1) Default Flatten() on a small NCHW input: (2, 4, 16, 16) -> (2, 1024).
    B, C, H, W = 2, 4, 16, 16
    x = jax.random.normal(key, (B, C, H, W), dtype=jnp.float32)
    y = jax.block_until_ready(pallas_flatten(x, start_dim=1, end_dim=-1))
    assert y.shape == (B, C * H * W), y.shape
    assert y.dtype == x.dtype
    assert jnp.array_equal(y, x.reshape(B, -1)), "mismatch vs reference (default)"

    # 2) Larger flattened width -> exercises the tiled / multi-block grid path
    #    ((4, 8, 32, 48) -> (4, 12288), lane tile 1024, grid (1, 12)).
    x2 = jax.random.normal(jax.random.PRNGKey(1), (4, 8, 32, 48), dtype=jnp.float32)
    y2 = jax.block_until_ready(pallas_flatten(x2))
    assert y2.shape == (4, 8 * 32 * 48)
    assert jnp.array_equal(y2, x2.reshape(4, -1)), "mismatch vs reference (tiled)"

    # 3) Non-default dims: Flatten(start_dim=2) -> (2, 4, 256).
    y3 = jax.block_until_ready(pallas_flatten(x, start_dim=2, end_dim=-1))
    assert y3.shape == (B, C, H * W)
    assert jnp.array_equal(y3, x.reshape(B, C, -1)), "mismatch vs reference (start_dim=2)"

    print("KERNEL_OK")
</pallas_src>

<mosaic_0001>
module attributes {stable_mosaic.version = 11 : i64} {
  func.func @_copy_kernel(%arg0: i32, %arg1: i32, %arg2: memref<2x1024xf32, #tpu.memory_space<vmem>>, %arg3: memref<2x1024xf32, #tpu.memory_space<vmem>>) attributes {dimension_semantics = [#tpu.dimension_semantics<parallel>, #tpu.dimension_semantics<parallel>], iteration_bounds = array<i64: 1, 1>, scalar_prefetch = 0 : i64, scratch_operands = 0 : i64, tpu.core_type = #tpu.core_type<tc>, window_params = [{transform_indices = @transform_0, window_bounds = array<i64: 2, 1024>}, {transform_indices = @transform_1, window_bounds = array<i64: 2, 1024>}]} {
    %c0 = arith.constant 0 : index
    %c0_0 = arith.constant 0 : index
    %0 = vector.load %arg2[%c0, %c0_0] : memref<2x1024xf32, #tpu.memory_space<vmem>>, vector<2x1024xf32>
    %c0_1 = arith.constant 0 : index
    %c0_2 = arith.constant 0 : index
    %1 = vector.load %arg3[%c0_1, %c0_2] : memref<2x1024xf32, #tpu.memory_space<vmem>>, vector<2x1024xf32>
    tpu.vector_store %arg3[%c0_1, %c0_2], %0 {strides = array<i32>} : memref<2x1024xf32, #tpu.memory_space<vmem>>, vector<2x1024xf32>,
    return
  }
  func.func @transform_0(%arg0: i32, %arg1: i32) -> (i32, i32) {
    %c0_i32 = arith.constant 0 : i32
    return %arg0, %arg1 : i32, i32
  }
  func.func @transform_1(%arg0: i32, %arg1: i32) -> (i32, i32) {
    %c0_i32 = arith.constant 0 : i32
    return %arg0, %arg1 : i32, i32
  }
}

</mosaic_0001>

<llo_original>
// kernel: tpu_custom_call.1
$region0: #{tpu_custom_call.1}
  #allocation0 [shape = 'u32[]', space=smem, size = 0x4, offset = 0x4, fixed_abs, tag = 'smem constant byte address 0x4 - core index']
  #allocation1 [shape = 'u32[144,128]{1,0:T(1,128)}', space=vmem, size = 0x12000, scoped, tag = 'internal scratch']
  %s0 = inlined_call_operand.hbm [shape: f32[2,1024], index: 0, kind: input, shape index: {}]
  %s1 = inlined_call_operand.hbm [shape: f32[2,1024], index: 1, kind: output, shape index: {}]
  %s2 = sld [smem:[#allocation0]]
  $region18: #{tpu_custom_call.1} parent=0
    _
  %s4 = ssub.s32 1, %s2
  %s5 = scalar_select 0, %s4, %s2
  $region1: #{tpu_custom_call.1} parent=0
    #allocation2 [shape = 'u8[8192]{0}', space=vmem, size = 0x2000, scoped, tag = 'input window, operand 0, single buffered']
    #allocation3 [shape = 's32[1]{0}', space=sflag, size = 0x4, scoped, tag = 'scoped memory for tpu_custom_call.1']
    #allocation4 [shape = 's32[1]{0}', space=sflag, size = 0x4, scoped, tag = 'scoped memory for tpu_custom_call.1']
    #allocation5 [shape = 'u8[8192]{0}', space=vmem, size = 0x2000, scoped, tag = 'output window, operand 0, single buffered']
    %6 = vsyncpa [#allocation3], 0
    %7 = vsyncpa [#allocation4], 0
    // Predicated region
    $region2: #{tpu_custom_call.1} parent=1 // pred_check
      _
    $region3: #{tpu_custom_call.1} parent=1 // pred_check_branch
      %9 = sbr.rel (0) target = $region5
    $region4: #{tpu_custom_call.1} parent=1 // pred_region
      %s11 = ssub.s32 256, 256
      %12 = vsyncadd [#allocation3], %s11
      %s14 = sshll.u32 [#allocation2], 4
      %s15 = int_to_ptr.vmem [resolvable:$true] %s14
      %17 = dma.hbm_to_vmem [thread:$0]  %s0, 256, %s15, [#allocation3]
    $region5: #{tpu_custom_call.1} parent=1 // pred_fallthru
      _
    // Predicated region
    $region6: #{tpu_custom_call.1} parent=1 // pred_check
      _
    $region7: #{tpu_custom_call.1} parent=1 // pred_check_branch
      %19 = sbr.rel (0) target = $region9
    $region8: #{tpu_custom_call.1} parent=1 // pred_region
      %20 = dma.done [#allocation3], 256
    $region9: #{tpu_custom_call.1} parent=1 // pred_fallthru
      _
    %v21 = vld [vmem:[#allocation2] sm:$0xff]
    %v22 = vld [vmem:[#allocation2 + $0x8] sm:$0xff]
    %23 = vst [vmem:[#allocation5] sm:$0xff] %v21
    %24 = vst [vmem:[#allocation5 + $0x8] sm:$0xff] %v22
    // Predicated region
    $region10: #{tpu_custom_call.1} parent=1 // pred_check
      _
    $region11: #{tpu_custom_call.1} parent=1 // pred_check_branch
      %26 = sbr.rel (0) target = $region13
    $region12: #{tpu_custom_call.1} parent=1 // pred_region
      %s28 = ssub.s32 256, 256
      %29 = vsyncadd [#allocation4], %s28
      %s31 = sshll.u32 [#allocation5], 4
      %s32 = int_to_ptr.vmem [resolvable:$true] %s31
      %34 = dma.vmem_to_hbm [thread:$0]  %s32, 256, %s1, [#allocation4]
    $region13: #{tpu_custom_call.1} parent=1 // pred_fallthru
      _
    // Predicated region
    $region14: #{tpu_custom_call.1} parent=1 // pred_check
      _
    $region15: #{tpu_custom_call.1} parent=1 // pred_check_branch
      %36 = sbr.rel (0) target = $region17
    $region16: #{tpu_custom_call.1} parent=1 // pred_region
      %37 = dma.done [#allocation4], 256
    $region17: #{tpu_custom_call.1} parent=1 // pred_fallthru
      _
    %38 = vsyncpa [#allocation3], 1
    %39 = vsyncpa [#allocation4], 1

</llo_original>
